<compile_context>
chip_gen: v5e
topology: v5e:2x2
jax: 0.10.0
libtpu: 0.0.40
codegen_flags: <defaults>
</compile_context>

<pallas_src>
import jax
import jax.numpy as jnp
from jax.experimental import pallas as pl
from jax.experimental.pallas import tpu as pltpu

# ---- hyper-parameters (mirror the module's __init__ kwargs) -----------------
OBS_DIM = 8
ACT_DIM = 8
HIDDEN_SIZES = (32, 32)
IN_DIM = OBS_DIM + ACT_DIM
H1, H2 = HIDDEN_SIZES

LANE = 128  # TPU vreg lane width


def _round_up(x, m):
    return (x + m - 1) // m * m


# ----------------------------- kernel ----------------------------------------
def _q_kernel(obs_ref, act_ref,
              w1o_ref, w1a_ref, b1_ref,
              w2_ref, b2_ref,
              w3_ref, b3_ref,
              out_ref):
    # Everything is [features, batch]; batch (TB) lives on the lane axis.
    # Layer 1: [H1,OBS]@[OBS,TB] + [H1,ACT]@[ACT,TB] + b1 -> [H1, TB]
    h = (jnp.dot(w1o_ref[...], obs_ref[...], preferred_element_type=jnp.float32)
         + jnp.dot(w1a_ref[...], act_ref[...], preferred_element_type=jnp.float32)
         + b1_ref[...])
    h = jnp.maximum(h, 0.0)                                    # relu (lane-dense)
    # Layer 2: [H2,H1]@[H1,TB] + b2 -> [H2, TB]
    h = jnp.dot(w2_ref[...], h, preferred_element_type=jnp.float32) + b2_ref[...]
    h = jnp.maximum(h, 0.0)                                    # relu
    # Layer 3 (output width 1): keep it off the MXU — VPU multiply + XLU
    # sublane reduce; result is already lane-major (1, TB).
    out_ref[...] = jnp.sum(h * w3_ref[...], axis=0, keepdims=True) + b3_ref[...]


# ----------------------------- wrapper ----------------------------------------
def action_value_forward(obs, act, params, *, tb=2048):
    """obs: [B, obs_dim], act: [B, act_dim]  ->  q: [B] (squeezed last dim)."""
    obs = obs.astype(jnp.float32)
    act = act.astype(jnp.float32)
    B = obs.shape[0]

    # Pad batch to a lane multiple first, then pick TB as a divisor of Bp
    # (avoids the "Bp nearly doubles" padding trap for awkward B).
    Bp = _round_up(B, LANE)
    TB = max(LANE, min(_round_up(tb, LANE), Bp))
    while Bp % TB != 0:
        TB -= LANE
    # v7x megacore: prefer >= 2 tiles on the parallel axis when batch allows.
    if Bp // TB < 2 and Bp >= 2 * LANE:
        half = (Bp // 2) // LANE * LANE
        while half > LANE and Bp % half != 0:
            half -= LANE
        if half >= LANE and Bp % half == 0:
            TB = half
    n_tiles = Bp // TB

    # Batch-on-lanes: feed transposed, zero-padded inputs [features, Bp].
    obs_t = jnp.pad(obs.T, ((0, 0), (0, Bp - B)))
    act_t = jnp.pad(act.T, ((0, 0), (0, Bp - B)))

    w1o, w1a = params["w1o_t"], params["w1a_t"]
    b1, w2, b2, w3, b3 = (params["b1"], params["w2_t"], params["b2"],
                          params["w3"], params["b3"])

    batch_map = lambda i: (0, i)   # batch tiles march along the lane axis
    const_map = lambda i: (0, 0)   # weights/biases: same block every step -> resident

    n_param_elems = sum(int(p.size) for p in (w1o, w1a, b1, w2, b2, w3, b3))
    cost = pl.CostEstimate(
        flops=2 * Bp * (IN_DIM * H1 + H1 * H2 + H2 * 1),
        transcendentals=0,
        bytes_accessed=4 * (Bp * (OBS_DIM + ACT_DIM + 1) + n_param_elems),
    )

    out = pl.pallas_call(
        _q_kernel,
        out_shape=jax.ShapeDtypeStruct((1, Bp), jnp.float32),   # lane-dense output
        grid=(n_tiles,),
        in_specs=[
            pl.BlockSpec((OBS_DIM, TB), batch_map),
            pl.BlockSpec((ACT_DIM, TB), batch_map),
            pl.BlockSpec(w1o.shape, const_map),   # (H1, OBS_DIM)
            pl.BlockSpec(w1a.shape, const_map),   # (H1, ACT_DIM)
            pl.BlockSpec(b1.shape, const_map),    # (H1, 1)
            pl.BlockSpec(w2.shape, const_map),    # (H2, H1)
            pl.BlockSpec(b2.shape, const_map),    # (H2, 1)
            pl.BlockSpec(w3.shape, const_map),    # (H2, 1)
            pl.BlockSpec(b3.shape, const_map),    # (1, 1)
        ],
        out_specs=pl.BlockSpec((1, TB), batch_map),
        compiler_params=pltpu.CompilerParams(
            dimension_semantics=("parallel",),   # shard batch tiles across TCs (v7x)
        ),
        cost_estimate=cost,
    )(obs_t, act_t, w1o, w1a, b1, w2, b2, w3, b3)

    return out[0, :B]   # torch.squeeze(q, -1)


# ----------------------------- params -----------------------------------------
def _init_params(key):
    """PyTorch-style Linear init (uniform +/- 1/sqrt(fan_in)).

    raw weights are stored [in, out]; kernel params are the transposed
    [out, in] forms (and column biases) for the batch-on-lanes layout.
    """
    sizes = [IN_DIM, H1, H2, 1]
    raw = {}
    for idx, (fi, fo) in enumerate(zip(sizes[:-1], sizes[1:]), start=1):
        key, kw, kb = jax.random.split(key, 3)
        bound = 1.0 / float(fi) ** 0.5
        raw[f"w{idx}"] = jax.random.uniform(kw, (fi, fo), jnp.float32, -bound, bound)
        raw[f"b{idx}"] = jax.random.uniform(kb, (1, fo), jnp.float32, -bound, bound)
    params = {
        # split W1 rows so W1_obs^T @ obs^T + W1_act^T @ act^T == (cat(obs,act) @ W1)^T
        "w1o_t": raw["w1"][:OBS_DIM, :].T,   # (H1, OBS_DIM)
        "w1a_t": raw["w1"][OBS_DIM:, :].T,   # (H1, ACT_DIM)
        "b1":    raw["b1"].T,                # (H1, 1)
        "w2_t":  raw["w2"].T,                # (H2, H1)
        "b2":    raw["b2"].T,                # (H2, 1)
        "w3":    raw["w3"],                  # (H2, 1) column (final-layer weights)
        "b3":    raw["b3"],                  # (1, 1)
    }
    return params, raw, key


# ----------------------------- demo / check ------------------------------------
if __name__ == "__main__":
    key = jax.random.PRNGKey(0)
    params, raw, key = _init_params(key)

    key, ko, ka = jax.random.split(key, 3)
    B = 8
    obs = jax.random.normal(ko, (B, OBS_DIM), jnp.float32)
    act = jax.random.normal(ka, (B, ACT_DIM), jnp.float32)

    q = action_value_forward(obs, act, params)
    jax.block_until_ready(q)

    # pure-JAX reference (uses the un-split, un-transposed weights, identical math)
    def ref_forward(obs, act):
        x = jnp.concatenate([obs, act], axis=-1)
        h = jnp.maximum(x @ raw["w1"] + raw["b1"], 0.0)
        h = jnp.maximum(h @ raw["w2"] + raw["b2"], 0.0)
        return (h @ raw["w3"] + raw["b3"])[:, 0]

    ref = ref_forward(obs, act)
    assert q.shape == (B,)
    assert jnp.allclose(q, ref, atol=1e-4, rtol=1e-4)
    print("KERNEL_OK")
</pallas_src>

<mosaic_0001>
module attributes {stable_mosaic.version = 11 : i64} {
  func.func @_q_kernel(%arg0: i32, %arg1: memref<8x128xf32, #tpu.memory_space<vmem>>, %arg2: memref<8x128xf32, #tpu.memory_space<vmem>>, %arg3: memref<32x8xf32, #tpu.memory_space<vmem>>, %arg4: memref<32x8xf32, #tpu.memory_space<vmem>>, %arg5: memref<32x1xf32, #tpu.memory_space<vmem>>, %arg6: memref<32x32xf32, #tpu.memory_space<vmem>>, %arg7: memref<32x1xf32, #tpu.memory_space<vmem>>, %arg8: memref<32x1xf32, #tpu.memory_space<vmem>>, %arg9: memref<1x1xf32, #tpu.memory_space<vmem>>, %arg10: memref<1x128xf32, #tpu.memory_space<vmem>>) attributes {dimension_semantics = [#tpu.dimension_semantics<parallel>], iteration_bounds = array<i64: 1>, scalar_prefetch = 0 : i64, scratch_operands = 0 : i64, tpu.core_type = #tpu.core_type<tc>, window_params = [{transform_indices = @transform_0, window_bounds = array<i64: 8, 128>}, {transform_indices = @transform_1, window_bounds = array<i64: 8, 128>}, {pipeline_mode = #tpu.pipeline_mode<synchronous>, transform_indices = @transform_2, window_bounds = array<i64: 32, 8>}, {pipeline_mode = #tpu.pipeline_mode<synchronous>, transform_indices = @transform_3, window_bounds = array<i64: 32, 8>}, {pipeline_mode = #tpu.pipeline_mode<synchronous>, transform_indices = @transform_4, window_bounds = array<i64: 32, 1>}, {pipeline_mode = #tpu.pipeline_mode<synchronous>, transform_indices = @transform_5, window_bounds = array<i64: 32, 32>}, {pipeline_mode = #tpu.pipeline_mode<synchronous>, transform_indices = @transform_6, window_bounds = array<i64: 32, 1>}, {pipeline_mode = #tpu.pipeline_mode<synchronous>, transform_indices = @transform_7, window_bounds = array<i64: 32, 1>}, {pipeline_mode = #tpu.pipeline_mode<synchronous>, transform_indices = @transform_8, window_bounds = array<i64: 1, 1>}, {transform_indices = @transform_9, window_bounds = array<i64: 1, 128>}]} {
    %c0 = arith.constant 0 : index
    %c0_0 = arith.constant 0 : index
    %0 = vector.load %arg3[%c0, %c0_0] : memref<32x8xf32, #tpu.memory_space<vmem>>, vector<32x8xf32>
    %c0_1 = arith.constant 0 : index
    %c0_2 = arith.constant 0 : index
    %1 = vector.load %arg1[%c0_1, %c0_2] : memref<8x128xf32, #tpu.memory_space<vmem>>, vector<8x128xf32>
    %cst = arith.constant dense<0.000000e+00> : vector<32x128xf32>
    %2 = tpu.matmul %0, %1, %cst {dimension_numbers = #tpu.dot_dimension_numbers<[1], [0], [0], [1], [0, 0, 1, 1], [], []>} : vector<32x8xf32>, vector<8x128xf32>, vector<32x128xf32> -> vector<32x128xf32>
    %c0_3 = arith.constant 0 : index
    %c0_4 = arith.constant 0 : index
    %3 = vector.load %arg4[%c0_3, %c0_4] : memref<32x8xf32, #tpu.memory_space<vmem>>, vector<32x8xf32>
    %c0_5 = arith.constant 0 : index
    %c0_6 = arith.constant 0 : index
    %4 = vector.load %arg2[%c0_5, %c0_6] : memref<8x128xf32, #tpu.memory_space<vmem>>, vector<8x128xf32>
    %cst_7 = arith.constant dense<0.000000e+00> : vector<32x128xf32>
    %5 = tpu.matmul %3, %4, %cst_7 {dimension_numbers = #tpu.dot_dimension_numbers<[1], [0], [0], [1], [0, 0, 1, 1], [], []>} : vector<32x8xf32>, vector<8x128xf32>, vector<32x128xf32> -> vector<32x128xf32>
    %6 = arith.addf %2, %5 : vector<32x128xf32>
    %c0_8 = arith.constant 0 : index
    %c0_9 = arith.constant 0 : index
    %7 = vector.load %arg5[%c0_8, %c0_9] : memref<32x1xf32, #tpu.memory_space<vmem>>, vector<32x1xf32>
    %8 = vector.broadcast %7 : vector<32x1xf32> to vector<32x128xf32>
    %9 = arith.addf %6, %8 : vector<32x128xf32>
    %cst_10 = arith.constant 0.000000e+00 : f32
    %10 = vector.broadcast %cst_10 : f32 to vector<32x128xf32>
    %11 = arith.maximumf %9, %10 : vector<32x128xf32>
    %c0_11 = arith.constant 0 : index
    %c0_12 = arith.constant 0 : index
    %12 = vector.load %arg6[%c0_11, %c0_12] : memref<32x32xf32, #tpu.memory_space<vmem>>, vector<32x32xf32>
    %cst_13 = arith.constant dense<0.000000e+00> : vector<32x128xf32>
    %13 = tpu.matmul %12, %11, %cst_13 {dimension_numbers = #tpu.dot_dimension_numbers<[1], [0], [0], [1], [0, 0, 1, 1], [], []>} : vector<32x32xf32>, vector<32x128xf32>, vector<32x128xf32> -> vector<32x128xf32>
    %c0_14 = arith.constant 0 : index
    %c0_15 = arith.constant 0 : index
    %14 = vector.load %arg7[%c0_14, %c0_15] : memref<32x1xf32, #tpu.memory_space<vmem>>, vector<32x1xf32>
    %15 = vector.broadcast %14 : vector<32x1xf32> to vector<32x128xf32>
    %16 = arith.addf %13, %15 : vector<32x128xf32>
    %cst_16 = arith.constant 0.000000e+00 : f32
    %17 = vector.broadcast %cst_16 : f32 to vector<32x128xf32>
    %18 = arith.maximumf %16, %17 : vector<32x128xf32>
    %c0_17 = arith.constant 0 : index
    %c0_18 = arith.constant 0 : index
    %19 = vector.load %arg8[%c0_17, %c0_18] : memref<32x1xf32, #tpu.memory_space<vmem>>, vector<32x1xf32>
    %20 = vector.broadcast %19 : vector<32x1xf32> to vector<32x128xf32>
    %21 = arith.mulf %18, %20 : vector<32x128xf32>
    %cst_19 = arith.constant dense<0.000000e+00> : vector<128xf32>
    %22 = vector.multi_reduction <add>, %21, %cst_19 [0] : vector<32x128xf32> to vector<128xf32>
    %23 = vector.shape_cast %22 : vector<128xf32> to vector<1x128xf32>
    %c0_20 = arith.constant 0 : index
    %c0_21 = arith.constant 0 : index
    %24 = vector.load %arg9[%c0_20, %c0_21] : memref<1x1xf32, #tpu.memory_space<vmem>>, vector<1x1xf32>
    %25 = vector.broadcast %24 : vector<1x1xf32> to vector<1x128xf32>
    %26 = arith.addf %23, %25 : vector<1x128xf32>
    %c0_22 = arith.constant 0 : index
    %c0_23 = arith.constant 0 : index
    %27 = vector.load %arg10[%c0_22, %c0_23] : memref<1x128xf32, #tpu.memory_space<vmem>>, vector<1x128xf32>
    tpu.vector_store %arg10[%c0_22, %c0_23], %26 {strides = array<i32>} : memref<1x128xf32, #tpu.memory_space<vmem>>, vector<1x128xf32>,
    return
  }
  func.func @transform_0(%arg0: i32) -> (i32, i32) {
    %c0_i32 = arith.constant 0 : i32
    %c0_i32_0 = arith.constant 0 : i32
    return %c0_i32, %arg0 : i32, i32
  }
  func.func @transform_1(%arg0: i32) -> (i32, i32) {
    %c0_i32 = arith.constant 0 : i32
    %c0_i32_0 = arith.constant 0 : i32
    return %c0_i32, %arg0 : i32, i32
  }
  func.func @transform_2(%arg0: i32) -> (i32, i32) {
    %c0_i32 = arith.constant 0 : i32
    %c0_i32_0 = arith.constant 0 : i32
    %c0_i32_1 = arith.constant 0 : i32
    return %c0_i32, %c0_i32_0 : i32, i32
  }
  func.func @transform_3(%arg0: i32) -> (i32, i32) {
    %c0_i32 = arith.constant 0 : i32
    %c0_i32_0 = arith.constant 0 : i32
    %c0_i32_1 = arith.constant 0 : i32
    return %c0_i32, %c0_i32_0 : i32, i32
  }
  func.func @transform_4(%arg0: i32) -> (i32, i32) {
    %c0_i32 = arith.constant 0 : i32
    %c0_i32_0 = arith.constant 0 : i32
    %c0_i32_1 = arith.constant 0 : i32
    return %c0_i32, %c0_i32_0 : i32, i32
  }
  func.func @transform_5(%arg0: i32) -> (i32, i32) {
    %c0_i32 = arith.constant 0 : i32
    %c0_i32_0 = arith.constant 0 : i32
    %c0_i32_1 = arith.constant 0 : i32
    return %c0_i32, %c0_i32_0 : i32, i32
  }
  func.func @transform_6(%arg0: i32) -> (i32, i32) {
    %c0_i32 = arith.constant 0 : i32
    %c0_i32_0 = arith.constant 0 : i32
    %c0_i32_1 = arith.constant 0 : i32
    return %c0_i32, %c0_i32_0 : i32, i32
  }
  func.func @transform_7(%arg0: i32) -> (i32, i32) {
    %c0_i32 = arith.constant 0 : i32
    %c0_i32_0 = arith.constant 0 : i32
    %c0_i32_1 = arith.constant 0 : i32
    return %c0_i32, %c0_i32_0 : i32, i32
  }
  func.func @transform_8(%arg0: i32) -> (i32, i32) {
    %c0_i32 = arith.constant 0 : i32
    %c0_i32_0 = arith.constant 0 : i32
    %c0_i32_1 = arith.constant 0 : i32
    return %c0_i32, %c0_i32_0 : i32, i32
  }
  func.func @transform_9(%arg0: i32) -> (i32, i32) {
    %c0_i32 = arith.constant 0 : i32
    %c0_i32_0 = arith.constant 0 : i32
    return %c0_i32, %arg0 : i32, i32
  }
}

</mosaic_0001>

<llo_original>
// kernel: tpu_custom_call.1
$region0: #{tpu_custom_call.1}
  #allocation0 [shape = 'u32[]', space=smem, size = 0x4, offset = 0x4, fixed_abs, tag = 'smem constant byte address 0x4 - core index']
  #allocation1 [shape = 'u32[72,128]{1,0:T(1,128)}', space=vmem, size = 0x9000, scoped, tag = 'internal scratch']
  #allocation2 [shape = 'f32[1,1]{1,0:T(1,128)S(1)}', space=vmem, size = 0x200, scoped, tag = 'scoped memory for tpu_custom_call.1']
  %s0 = inlined_call_operand.vmem [shape: f32[8,128], index: 0, kind: input, shape index: {}]
  %s1 = inlined_call_operand.vmem [shape: f32[8,128], index: 1, kind: input, shape index: {}]
  %s2 = inlined_call_operand.vmem [shape: f32[32,8], index: 2, kind: input, shape index: {}]
  %s3 = inlined_call_operand.vmem [shape: f32[32,8], index: 3, kind: input, shape index: {}]
  %s4 = inlined_call_operand.vmem [shape: f32[32,1], index: 4, kind: input, shape index: {}]
  %s5 = inlined_call_operand.vmem [shape: f32[32,32], index: 5, kind: input, shape index: {}]
  %s6 = inlined_call_operand.vmem [shape: f32[32,1], index: 6, kind: input, shape index: {}]
  %s7 = inlined_call_operand.vmem [shape: f32[32,1], index: 7, kind: input, shape index: {}]
  %s8 = inlined_call_operand.<no memory space> [shape: f32[1,1], index: 8, kind: input, shape index: {}]
  %s9 = inlined_call_operand.hbm [shape: f32[1,128], index: 9, kind: output, shape index: {}]
  %s10 = sld [smem:[#allocation0]]
  $region46: #{tpu_custom_call.1} parent=0
    _
  %s12 = ssub.s32 1, %s10
  %s13 = scalar_select 0, %s12, %s10
  %v14 = vstv %s8
  %15 = vst [vmem:[#allocation2] sm:$0x1] %v14
  $region1: #{tpu_custom_call.1} parent=0
    #allocation3 [shape = 'u8[512]{0}', space=vmem, size = 0x400, scoped, tag = 'output window, operand 0, single buffered']
    #allocation4 [shape = 's32[1]{0}', space=sflag, size = 0x4, scoped, tag = 'scoped memory for tpu_custom_call.1']
    %16 = vsyncpa [#allocation4], 0
    // Predicated region
    $region2: #{tpu_custom_call.1} parent=1 // pred_check
      _
    $region3: #{tpu_custom_call.1} parent=1 // pred_check_branch
      %18 = sbr.rel (0) target = $region5
    $region4: #{tpu_custom_call.1} parent=1 // pred_region
      _
    $region5: #{tpu_custom_call.1} parent=1 // pred_fallthru
      _
    // Predicated region
    $region6: #{tpu_custom_call.1} parent=1 // pred_check
      _
    $region7: #{tpu_custom_call.1} parent=1 // pred_check_branch
      %20 = sbr.rel (0) target = $region9
    $region8: #{tpu_custom_call.1} parent=1 // pred_region
      _
    $region9: #{tpu_custom_call.1} parent=1 // pred_fallthru
      _
    // Predicated region
    $region10: #{tpu_custom_call.1} parent=1 // pred_check
      _
    $region11: #{tpu_custom_call.1} parent=1 // pred_check_branch
      %22 = sbr.rel (0) target = $region13
    $region12: #{tpu_custom_call.1} parent=1 // pred_region
      _
    $region13: #{tpu_custom_call.1} parent=1 // pred_fallthru
      _
    // Predicated region
    $region14: #{tpu_custom_call.1} parent=1 // pred_check
      _
    $region15: #{tpu_custom_call.1} parent=1 // pred_check_branch
      %24 = sbr.rel (0) target = $region17
    $region16: #{tpu_custom_call.1} parent=1 // pred_region
      _
    $region17: #{tpu_custom_call.1} parent=1 // pred_fallthru
      _
    // Predicated region
    $region18: #{tpu_custom_call.1} parent=1 // pred_check
      _
    $region19: #{tpu_custom_call.1} parent=1 // pred_check_branch
      %26 = sbr.rel (0) target = $region21
    $region20: #{tpu_custom_call.1} parent=1 // pred_region
      _
    $region21: #{tpu_custom_call.1} parent=1 // pred_fallthru
      _
    // Predicated region
    $region22: #{tpu_custom_call.1} parent=1 // pred_check
      _
    $region23: #{tpu_custom_call.1} parent=1 // pred_check_branch
      %28 = sbr.rel (0) target = $region25
    $region24: #{tpu_custom_call.1} parent=1 // pred_region
      _
    $region25: #{tpu_custom_call.1} parent=1 // pred_fallthru
      _
    // Predicated region
    $region26: #{tpu_custom_call.1} parent=1 // pred_check
      _
    $region27: #{tpu_custom_call.1} parent=1 // pred_check_branch
      %30 = sbr.rel (0) target = $region29
    $region28: #{tpu_custom_call.1} parent=1 // pred_region
      _
    $region29: #{tpu_custom_call.1} parent=1 // pred_fallthru
      _
    // Predicated region
    $region30: #{tpu_custom_call.1} parent=1 // pred_check
      _
    $region31: #{tpu_custom_call.1} parent=1 // pred_check_branch
      %32 = sbr.rel (0) target = $region33
    $region32: #{tpu_custom_call.1} parent=1 // pred_region
      _
    $region33: #{tpu_custom_call.1} parent=1 // pred_fallthru
      _
    // Predicated region
    $region34: #{tpu_custom_call.1} parent=1 // pred_check
      _
    $region35: #{tpu_custom_call.1} parent=1 // pred_check_branch
      %34 = sbr.rel (0) target = $region37
    $region36: #{tpu_custom_call.1} parent=1 // pred_region
      _
    $region37: #{tpu_custom_call.1} parent=1 // pred_fallthru
      _
    %v35 = vld [vmem:[%s2] sm:$0xff]
    %v36 = vld [vmem:[%s2 + $0x8] sm:$0xff]
    %v37 = vld [vmem:[%s2 + $0x10] sm:$0xff]
    %v38 = vld [vmem:[%s2 + $0x18] sm:$0xff]
    %v39 = vld [vmem:[%s0] sm:$0xff]
    %v40 = vld [vmem:[%s3] sm:$0xff]
    %v41 = vld [vmem:[%s3 + $0x8] sm:$0xff]
    %v42 = vld [vmem:[%s3 + $0x10] sm:$0xff]
    %v43 = vld [vmem:[%s3 + $0x18] sm:$0xff]
    %v44 = vld [vmem:[%s1] sm:$0xff]
    %vm45 = vcmask 64512
    %v47 = vsel %vm45, %v40, 0
    %v50 = vsel %vm45, %v41, 0
    %v53 = vsel %vm45, %v42, 0
    %v56 = vsel %vm45, %v43, 0
    %58 = vmatpush.msra.mxu0 0.0
    %59 = vmatpush.msra.mxu0 0.0
    %60 = vmatpush.msra.mxu0 0.0
    %61 = vmatpush.msra.mxu0 0.0
    %62 = vmatpush.msra.mxu0 0.0
    %63 = vmatpush.msra.mxu0 0.0
    %64 = vmatpush.msra.mxu0 0.0
    %65 = vmatpush.msra.mxu0 0.0
    %66 = vmatpush.msra.mxu0 0.0
    %67 = vmatpush.msra.mxu0 0.0
    %68 = vmatpush.msra.mxu0 0.0
    %69 = vmatpush.msra.mxu0 0.0
    %70 = vmatpush.msra.mxu0 0.0
    %71 = vmatpush.msra.mxu0 0.0
    %72 = vmatpush.msra.mxu0 0.0
    %73 = vmatpush.msra.mxu0 %v44
    %74 = vmatmul.f32.gmra.mxu0 %v47
    %v75 = vpop.f32.mrf.mxu0
    %v76 = vadd.f32 0.0, %v75
    %77 = vmatmul.f32.gmra.mxu0 %v50
    %v78 = vpop.f32.mrf.mxu0
    %v79 = vadd.f32 0.0, %v78
    %80 = vmatmul.f32.gmra.mxu0 %v53
    %v81 = vpop.f32.mrf.mxu0
    %v82 = vadd.f32 0.0, %v81
    %83 = vmatmul.f32.gmra.mxu0 %v56
    %v84 = vpop.f32.mrf.mxu0
    %v85 = vadd.f32 0.0, %v84
    %86 = vdwg.mxu0
    %v88 = vsel %vm45, %v35, 0
    %v91 = vsel %vm45, %v36, 0
    %v94 = vsel %vm45, %v37, 0
    %v97 = vsel %vm45, %v38, 0
    %99 = vmatpush.msra.mxu0 0.0
    %100 = vmatpush.msra.mxu0 0.0
    %101 = vmatpush.msra.mxu0 0.0
    %102 = vmatpush.msra.mxu0 0.0
    %103 = vmatpush.msra.mxu0 0.0
    %104 = vmatpush.msra.mxu0 0.0
    %105 = vmatpush.msra.mxu0 0.0
    %106 = vmatpush.msra.mxu0 0.0
    %107 = vmatpush.msra.mxu0 0.0
    %108 = vmatpush.msra.mxu0 0.0
    %109 = vmatpush.msra.mxu0 0.0
    %110 = vmatpush.msra.mxu0 0.0
    %111 = vmatpush.msra.mxu0 0.0
    %112 = vmatpush.msra.mxu0 0.0
    %113 = vmatpush.msra.mxu0 0.0
    %114 = vmatpush.msra.mxu0 %v39
    %115 = vmatmul.f32.gmra.mxu0 %v88
    %v116 = vpop.f32.mrf.mxu0
    %v117 = vadd.f32 %v76, %v116
    %118 = vmatmul.f32.gmra.mxu0 %v91
    %v119 = vpop.f32.mrf.mxu0
    %v120 = vadd.f32 %v79, %v119
    %121 = vmatmul.f32.gmra.mxu0 %v94
    %v122 = vpop.f32.mrf.mxu0
    %v123 = vadd.f32 %v82, %v122
    %124 = vmatmul.f32.gmra.mxu0 %v97
    %v125 = vpop.f32.mrf.mxu0
    %v126 = vadd.f32 %v85, %v125
    %127 = vdwg.mxu0
    %v128 = vld [vmem:[%s4] sm:$0xff]
    %v129 = vld [vmem:[%s4 + $0x8] sm:$0xff]
    %v130 = vld [vmem:[%s4 + $0x10] sm:$0xff]
    %v131 = vld [vmem:[%s4 + $0x18] sm:$0xff]
    %133 = vset.pattern.permute.xlu0 0
    %134 = vperm.xlu0 %133, %v128
    %v135 = vpop.permute.xlu0 %134
    %138 = vset.pattern.permute.xlu0 0
    %139 = vperm.xlu0 %138, %v129
    %v140 = vpop.permute.xlu0 %139
    %143 = vset.pattern.permute.xlu0 0
    %144 = vperm.xlu0 %143, %v130
    %v145 = vpop.permute.xlu0 %144
    %148 = vset.pattern.permute.xlu0 0
    %149 = vperm.xlu0 %148, %v131
    %v150 = vpop.permute.xlu0 %149
    %v152 = vadd.f32 %v117, %v135
    %v153 = vadd.f32 %v120, %v140
    %v154 = vadd.f32 %v123, %v145
    %v155 = vadd.f32 %v126, %v150
    %v156 = vmax.f32 %v152, 0.0
    %v157 = vmax.f32 %v153, 0.0
    %v158 = vmax.f32 %v154, 0.0
    %v159 = vmax.f32 %v155, 0.0
    %v160 = vld [vmem:[%s5] sm:$0xff]
    %v161 = vld [vmem:[%s5 + $0x8] sm:$0xff]
    %v162 = vld [vmem:[%s5 + $0x10] sm:$0xff]
    %v163 = vld [vmem:[%s5 + $0x18] sm:$0xff]
    %v164 = vld [vmem:[%s6] sm:$0xff]
    %v165 = vld [vmem:[%s6 + $0x8] sm:$0xff]
    %v166 = vld [vmem:[%s6 + $0x10] sm:$0xff]
    %v167 = vld [vmem:[%s6 + $0x18] sm:$0xff]
    %169 = vset.pattern.permute.xlu0 0
    %170 = vperm.xlu0 %169, %v164
    %v171 = vpop.permute.xlu0 %170
    %174 = vset.pattern.permute.xlu0 0
    %175 = vperm.xlu0 %174, %v165
    %v176 = vpop.permute.xlu0 %175
    %179 = vset.pattern.permute.xlu0 0
    %180 = vperm.xlu0 %179, %v166
    %v181 = vpop.permute.xlu0 %180
    %184 = vset.pattern.permute.xlu0 0
    %185 = vperm.xlu0 %184, %v167
    %v186 = vpop.permute.xlu0 %185
    %vm188 = vcmask 261120
    %v190 = vsel %vm188, %v160, 0
    %v193 = vsel %vm188, %v161, 0
    %v196 = vsel %vm188, %v162, 0
    %v199 = vsel %vm188, %v163, 0
    %201 = vmatpush.msra.mxu0 0.0
    %202 = vmatpush.msra.mxu0 0.0
    %203 = vmatpush.msra.mxu0 0.0
    %204 = vmatpush.msra.mxu0 0.0
    %205 = vmatpush.msra.mxu0 0.0
    %206 = vmatpush.msra.mxu0 0.0
    %207 = vmatpush.msra.mxu0 0.0
    %208 = vmatpush.msra.mxu0 0.0
    %209 = vmatpush.msra.mxu0 0.0
    %210 = vmatpush.msra.mxu0 0.0
    %211 = vmatpush.msra.mxu0 0.0
    %212 = vmatpush.msra.mxu0 0.0
    %213 = vmatpush.msra.mxu0 %v159
    %214 = vmatpush.msra.mxu0 %v158
    %215 = vmatpush.msra.mxu0 %v157
    %216 = vmatpush.msra.mxu0 %v156
    %217 = vmatmul.f32.gmra.mxu0 %v190
    %v218 = vpop.f32.mrf.mxu0
    %v219 = vadd.f32 %v171, %v218
    %220 = vmatmul.f32.gmra.mxu0 %v193
    %v221 = vpop.f32.mrf.mxu0
    %v222 = vadd.f32 %v176, %v221
    %223 = vmatmul.f32.gmra.mxu0 %v196
    %v224 = vpop.f32.mrf.mxu0
    %v225 = vadd.f32 %v181, %v224
    %226 = vmatmul.f32.gmra.mxu0 %v199
    %v227 = vpop.f32.mrf.mxu0
    %v228 = vadd.f32 %v186, %v227
    %229 = vdwg.mxu0
    %v230 = vmax.f32 %v219, 0.0
    %v231 = vmax.f32 %v222, 0.0
    %v232 = vmax.f32 %v225, 0.0
    %v233 = vmax.f32 %v228, 0.0
    %v234 = vld [vmem:[%s7] sm:$0xff]
    %v235 = vld [vmem:[%s7 + $0x8] sm:$0xff]
    %v236 = vld [vmem:[%s7 + $0x10] sm:$0xff]
    %v237 = vld [vmem:[%s7 + $0x18] sm:$0xff]
    %239 = vset.pattern.permute.xlu0 0
    %240 = vperm.xlu0 %239, %v234
    %v241 = vpop.permute.xlu0 %240
    %244 = vset.pattern.permute.xlu0 0
    %245 = vperm.xlu0 %244, %v235
    %v246 = vpop.permute.xlu0 %245
    %249 = vset.pattern.permute.xlu0 0
    %250 = vperm.xlu0 %249, %v236
    %v251 = vpop.permute.xlu0 %250
    %254 = vset.pattern.permute.xlu0 0
    %255 = vperm.xlu0 %254, %v237
    %v256 = vpop.permute.xlu0 %255
    %v258 = vmul.f32 %v230, %v241
    %v259 = vmul.f32 %v231, %v246
    %v260 = vmul.f32 %v232, %v251
    %v261 = vmul.f32 %v233, %v256
    %v262 = vadd.f32 %v258, %v259
    %v263 = vadd.f32 %v262, %v260
    %v264 = vadd.f32 %v263, %v261
    %v265 = vrot.slane %v264, 4
    %v266 = vadd.f32 %v264, %v265
    %v267 = vrot.slane %v266, 2
    %v268 = vadd.f32 %v266, %v267
    %v269 = vrot.slane %v268, 1
    %v270 = vadd.f32 %v268, %v269
    %v271 = vld [vmem:[#allocation2] sm:$0x1]
    %273 = vset.pattern.permute.xlu0 0
    %274 = vperm.xlu0 %273, %v271
    %v275 = vpop.permute.xlu0 %274
    %v277 = vperm.slane %v275, 0
    %v278 = vadd.f32 %v270, %v277
    %279 = vst [vmem:[#allocation3] sm:$0x1] %v278
    // Predicated region
    $region38: #{tpu_custom_call.1} parent=1 // pred_check
      _
    $region39: #{tpu_custom_call.1} parent=1 // pred_check_branch
      %281 = sbr.rel (0) target = $region41
    $region40: #{tpu_custom_call.1} parent=1 // pred_region
      %283 = vsyncadd [#allocation4], 0
      %s285 = sshll.u32 [#allocation3], 4
      %s286 = int_to_ptr.vmem [resolvable:$true] %s285
      %s287 = sshll.u32 %s9, 4
      %s288 = int_to_ptr.hbm [resolvable:$true] %s287
      %290 = dma.vmem_to_hbm [thread:$0]  %s286, 16, %s288, [#allocation4]
    $region41: #{tpu_custom_call.1} parent=1 // pred_fallthru
      _
    // Predicated region
    $region42: #{tpu_custom_call.1} parent=1 // pred_check
      _
    $region43: #{tpu_custom_call.1} parent=1 // pred_check_branch
      %292 = sbr.rel (0) target = $region45
    $region44: #{tpu_custom_call.1} parent=1 // pred_region
      %294 = dma.done [#allocation4], 16
    $region45: #{tpu_custom_call.1} parent=1 // pred_fallthru
      _
    %295 = vsyncpa [#allocation4], 1

</llo_original>
